<compile_context>
chip_gen: v7x
topology: tpu7x:2x2x1
jax: 0.10.0
libtpu: 0.0.40
codegen_flags: <defaults>
</compile_context>

<pallas_src>
import jax
import jax.numpy as jnp
from jax.experimental import pallas as pl
from jax.experimental.pallas import tpu as pltpu


# ---------------------------------------------------------------------------
# Path 1: resident weights, in-kernel (fully unrolled) layer loop.
# ---------------------------------------------------------------------------
def _deep_net_resident_kernel(x_ref, w_ref, b_ref, o_ref):
    """x:(TB,D) f32, w:(L,D,D) bf16 (in,out), b:(L,1,D) f32, o:(TB,D) f32."""
    num_layers = w_ref.shape[0]
    h = x_ref[...].astype(jnp.bfloat16)             # bf16 feed for the MXU
    for l in range(num_layers):                     # static unroll
        acc = jnp.dot(h, w_ref[l], preferred_element_type=jnp.float32)
        relu = jnp.maximum(acc + b_ref[l], 0.0)     # f32 bias add + ReLU
        if l == num_layers - 1:
            o_ref[...] = relu.astype(o_ref.dtype)   # write from f32 accumulator
        else:
            h = relu.astype(jnp.bfloat16)           # carry bf16 activations


# ---------------------------------------------------------------------------
# Path 2: weights streamed one layer per grid step (large parameter stacks).
# ---------------------------------------------------------------------------
def _deep_net_streamed_kernel(x_ref, w_ref, b_ref, o_ref, h_ref):
    """x:(TB,D) f32, w:(D,D) bf16 (current layer, layer dim squeezed),
    b:(L,1,D) f32 resident, o:(TB,D) f32, h:(TB,D) bf16 activation scratch."""
    l = pl.program_id(1)
    last = pl.num_programs(1) - 1

    @pl.when(l == 0)
    def _():
        h_ref[...] = x_ref[...].astype(h_ref.dtype)

    acc = jnp.dot(h_ref[...], w_ref[...], preferred_element_type=jnp.float32)
    relu = jnp.maximum(acc + b_ref[l], 0.0)

    @pl.when(l == last)
    def _():
        o_ref[...] = relu.astype(o_ref.dtype)       # f32 accumulator -> output

    @pl.when(l < last)
    def _():
        h_ref[...] = relu.astype(h_ref.dtype)       # bf16 scratch for next layer


# ---------------------------------------------------------------------------
# Parameter prep + forward wrapper.
# ---------------------------------------------------------------------------
def prepare_params(weights, biases):
    """One-time prep (hoisted out of the per-call forward path).

    weights: (L, D_out, D_in) in PyTorch nn.Linear layout; biases: (L, D).
    Returns w_t: (L, D_in, D_out) bf16 (kernel computes h @ W + b == x @ W.T + b)
    and b: (L, 1, D) f32 lane-dense bias tiles.
    """
    L = weights.shape[0]
    w_t = jnp.transpose(weights, (0, 2, 1)).astype(jnp.bfloat16)
    b = biases.astype(jnp.float32).reshape(L, 1, biases.shape[-1])
    return w_t, b


def deep_network_forward(x, w_t, b, *, tile_b: int = 256,
                         resident_param_budget_bytes: int = 8 * 1024 * 1024):
    """x: (B, D) f32; w_t: (L, D, D) bf16 (in, out); b: (L, 1, D) f32."""
    B, D = x.shape
    L = w_t.shape[0]
    tb = min(tile_b, B)
    assert B % tb == 0, "batch must be a multiple of the batch tile"
    num_b = B // tb

    w_bytes = w_t.size * w_t.dtype.itemsize
    b_bytes = b.size * b.dtype.itemsize
    x_bytes = x.size * x.dtype.itemsize
    o_bytes = B * D * x.dtype.itemsize

    if w_bytes + b_bytes <= resident_param_budget_bytes:
        # -------- resident-weights path: grid over batch tiles only --------
        cost = pl.CostEstimate(
            flops=2 * B * D * D * L,
            transcendentals=0,
            bytes_accessed=x_bytes + o_bytes + w_bytes + b_bytes,
        )
        return pl.pallas_call(
            _deep_net_resident_kernel,
            out_shape=jax.ShapeDtypeStruct((B, D), x.dtype),
            grid_spec=pltpu.PrefetchScalarGridSpec(
                num_scalar_prefetch=0,
                grid=(num_b,),
                in_specs=[
                    pl.BlockSpec((tb, D), lambda i: (i, 0)),        # batch tile
                    pl.BlockSpec((L, D, D), lambda i: (0, 0, 0)),   # resident weights
                    pl.BlockSpec((L, 1, D), lambda i: (0, 0, 0)),   # resident biases
                ],
                out_specs=pl.BlockSpec((tb, D), lambda i: (i, 0)),
            ),
            compiler_params=pltpu.CompilerParams(
                dimension_semantics=("parallel",),
            ),
            cost_estimate=cost,
        )(x, w_t, b)

    # -------- streamed path: one layer's weight block per grid step --------
    # TODO(synk): for very large D also tile the weight's output dim (extra N
    # grid axis, accumulate per n-slab) so the (D, D) block fits v7x's 64 MiB VMEM.
    cost = pl.CostEstimate(
        flops=2 * B * D * D * L,
        transcendentals=0,
        bytes_accessed=x_bytes + o_bytes + num_b * w_bytes + b_bytes,
    )
    return pl.pallas_call(
        _deep_net_streamed_kernel,
        out_shape=jax.ShapeDtypeStruct((B, D), x.dtype),
        grid_spec=pltpu.PrefetchScalarGridSpec(
            num_scalar_prefetch=0,
            grid=(num_b, L),
            in_specs=[
                pl.BlockSpec((tb, D), lambda i, l: (i, 0)),                # x tile
                pl.BlockSpec((pl.Squeezed(), D, D), lambda i, l: (l, 0, 0)),  # layer weight
                pl.BlockSpec((L, 1, D), lambda i, l: (0, 0, 0)),           # resident biases
            ],
            out_specs=pl.BlockSpec((tb, D), lambda i, l: (i, 0)),
            scratch_shapes=[pltpu.VMEM((tb, D), jnp.bfloat16)],            # bf16 activations
        ),
        compiler_params=pltpu.CompilerParams(
            dimension_semantics=("parallel", "arbitrary"),
        ),
        cost_estimate=cost,
    )(x, w_t, b)


def _reference_forward(x, weights, biases):
    """Pure-JAX reference matching torch semantics and the kernel's bf16 MXU feed."""
    h = x.astype(jnp.float32)
    for l in range(weights.shape[0]):
        w_bf = weights[l].T.astype(jnp.bfloat16)
        h_bf = h.astype(jnp.bfloat16)
        h = jnp.dot(h_bf, w_bf, preferred_element_type=jnp.float32)
        h = h + biases[l].astype(jnp.float32)
        h = jnp.maximum(h, 0.0)
    return h.astype(x.dtype)


if __name__ == "__main__":
    input_dim = 128
    layer_num = 3
    batch = 512  # two 256-row batch tiles -> both grid axes / both v7x TCs exercised

    key = jax.random.PRNGKey(0)
    kx, kw, kb = jax.random.split(key, 3)

    # Deterministic synthetic parameters (torch.nn.Linear layout: (out, in)).
    bound = 1.0 / (input_dim ** 0.5)
    x = jax.random.normal(kx, (batch, input_dim), dtype=jnp.float32)
    weights = jax.random.uniform(
        kw, (layer_num, input_dim, input_dim),
        minval=-bound, maxval=bound, dtype=jnp.float32)
    biases = jax.random.uniform(
        kb, (layer_num, input_dim),
        minval=-bound, maxval=bound, dtype=jnp.float32)

    # One-time prep (transpose + bf16 cast + bias reshape), hoisted out of the
    # per-call forward path.
    w_t, b2d = prepare_params(weights, biases)

    out = deep_network_forward(x, w_t, b2d)
    out = jax.block_until_ready(out)

    ref = _reference_forward(x, weights, biases)
    assert out.shape == (batch, input_dim)
    max_err = float(jnp.max(jnp.abs(out - ref)))
    assert jnp.allclose(out, ref, atol=2e-2, rtol=2e-2), (
        f"mismatch vs reference (max abs err {max_err})")

    print("KERNEL_OK")
</pallas_src>

<mosaic_0001>
module attributes {stable_mosaic.version = 11 : i64} {
  func.func @_deep_net_resident_kernel(%arg0: i32, %arg1: memref<256x128xf32, #tpu.memory_space<vmem>>, %arg2: memref<3x128x128xbf16, #tpu.memory_space<vmem>>, %arg3: memref<3x1x128xf32, #tpu.memory_space<vmem>>, %arg4: memref<256x128xf32, #tpu.memory_space<vmem>>) attributes {dimension_semantics = [#tpu.dimension_semantics<parallel>], iteration_bounds = array<i64: 2>, scalar_prefetch = 0 : i64, scratch_operands = 0 : i64, tpu.core_type = #tpu.core_type<tc>, window_params = [{transform_indices = @transform_0, window_bounds = array<i64: 256, 128>}, {pipeline_mode = #tpu.pipeline_mode<synchronous>, transform_indices = @transform_1, window_bounds = array<i64: 3, 128, 128>}, {pipeline_mode = #tpu.pipeline_mode<synchronous>, transform_indices = @transform_2, window_bounds = array<i64: 3, 1, 128>}, {transform_indices = @transform_3, window_bounds = array<i64: 256, 128>}]} {
    %c0 = arith.constant 0 : index
    %c0_0 = arith.constant 0 : index
    %0 = vector.load %arg1[%c0, %c0_0] : memref<256x128xf32, #tpu.memory_space<vmem>>, vector<256x128xf32>
    %1 = arith.truncf %0 : vector<256x128xf32> to vector<256x128xbf16>
    %c0_1 = arith.constant 0 : index
    %c0_2 = arith.constant 0 : index
    %c0_3 = arith.constant 0 : index
    %2 = vector.load %arg2[%c0_1, %c0_2, %c0_3] : memref<3x128x128xbf16, #tpu.memory_space<vmem>>, vector<1x128x128xbf16>
    %3 = vector.shape_cast %2 : vector<1x128x128xbf16> to vector<128x128xbf16>
    %cst = arith.constant dense<0.000000e+00> : vector<256x128xf32>
    %4 = tpu.matmul %1, %3, %cst {dimension_numbers = #tpu.dot_dimension_numbers<[1], [0], [0], [1], [0, 0, 1, 1], [], []>} : vector<256x128xbf16>, vector<128x128xbf16>, vector<256x128xf32> -> vector<256x128xf32>
    %c0_4 = arith.constant 0 : index
    %c0_5 = arith.constant 0 : index
    %c0_6 = arith.constant 0 : index
    %5 = vector.load %arg3[%c0_4, %c0_5, %c0_6] : memref<3x1x128xf32, #tpu.memory_space<vmem>>, vector<1x1x128xf32>
    %6 = vector.shape_cast %5 : vector<1x1x128xf32> to vector<1x128xf32>
    %7 = vector.broadcast %6 : vector<1x128xf32> to vector<256x128xf32>
    %8 = arith.addf %4, %7 : vector<256x128xf32>
    %cst_7 = arith.constant 0.000000e+00 : f32
    %9 = vector.broadcast %cst_7 : f32 to vector<256x128xf32>
    %10 = arith.maximumf %8, %9 : vector<256x128xf32>
    %11 = arith.truncf %10 : vector<256x128xf32> to vector<256x128xbf16>
    %c1 = arith.constant 1 : index
    %c0_8 = arith.constant 0 : index
    %c0_9 = arith.constant 0 : index
    %12 = vector.load %arg2[%c1, %c0_8, %c0_9] : memref<3x128x128xbf16, #tpu.memory_space<vmem>>, vector<1x128x128xbf16>
    %13 = vector.shape_cast %12 : vector<1x128x128xbf16> to vector<128x128xbf16>
    %cst_10 = arith.constant dense<0.000000e+00> : vector<256x128xf32>
    %14 = tpu.matmul %11, %13, %cst_10 {dimension_numbers = #tpu.dot_dimension_numbers<[1], [0], [0], [1], [0, 0, 1, 1], [], []>} : vector<256x128xbf16>, vector<128x128xbf16>, vector<256x128xf32> -> vector<256x128xf32>
    %c1_11 = arith.constant 1 : index
    %c0_12 = arith.constant 0 : index
    %c0_13 = arith.constant 0 : index
    %15 = vector.load %arg3[%c1_11, %c0_12, %c0_13] : memref<3x1x128xf32, #tpu.memory_space<vmem>>, vector<1x1x128xf32>
    %16 = vector.shape_cast %15 : vector<1x1x128xf32> to vector<1x128xf32>
    %17 = vector.broadcast %16 : vector<1x128xf32> to vector<256x128xf32>
    %18 = arith.addf %14, %17 : vector<256x128xf32>
    %cst_14 = arith.constant 0.000000e+00 : f32
    %19 = vector.broadcast %cst_14 : f32 to vector<256x128xf32>
    %20 = arith.maximumf %18, %19 : vector<256x128xf32>
    %21 = arith.truncf %20 : vector<256x128xf32> to vector<256x128xbf16>
    %c2 = arith.constant 2 : index
    %c0_15 = arith.constant 0 : index
    %c0_16 = arith.constant 0 : index
    %22 = vector.load %arg2[%c2, %c0_15, %c0_16] : memref<3x128x128xbf16, #tpu.memory_space<vmem>>, vector<1x128x128xbf16>
    %23 = vector.shape_cast %22 : vector<1x128x128xbf16> to vector<128x128xbf16>
    %cst_17 = arith.constant dense<0.000000e+00> : vector<256x128xf32>
    %24 = tpu.matmul %21, %23, %cst_17 {dimension_numbers = #tpu.dot_dimension_numbers<[1], [0], [0], [1], [0, 0, 1, 1], [], []>} : vector<256x128xbf16>, vector<128x128xbf16>, vector<256x128xf32> -> vector<256x128xf32>
    %c2_18 = arith.constant 2 : index
    %c0_19 = arith.constant 0 : index
    %c0_20 = arith.constant 0 : index
    %25 = vector.load %arg3[%c2_18, %c0_19, %c0_20] : memref<3x1x128xf32, #tpu.memory_space<vmem>>, vector<1x1x128xf32>
    %26 = vector.shape_cast %25 : vector<1x1x128xf32> to vector<1x128xf32>
    %27 = vector.broadcast %26 : vector<1x128xf32> to vector<256x128xf32>
    %28 = arith.addf %24, %27 : vector<256x128xf32>
    %cst_21 = arith.constant 0.000000e+00 : f32
    %29 = vector.broadcast %cst_21 : f32 to vector<256x128xf32>
    %30 = arith.maximumf %28, %29 : vector<256x128xf32>
    %c0_22 = arith.constant 0 : index
    %c0_23 = arith.constant 0 : index
    %31 = vector.load %arg4[%c0_22, %c0_23] : memref<256x128xf32, #tpu.memory_space<vmem>>, vector<256x128xf32>
    tpu.vector_store %arg4[%c0_22, %c0_23], %30 {strides = array<i32>} : memref<256x128xf32, #tpu.memory_space<vmem>>, vector<256x128xf32>,
    return
  }
  func.func @transform_0(%arg0: i32) -> (i32, i32) {
    %c0_i32 = arith.constant 0 : i32
    %c0_i32_0 = arith.constant 0 : i32
    return %arg0, %c0_i32 : i32, i32
  }
  func.func @transform_1(%arg0: i32) -> (i32, i32, i32) {
    %c0_i32 = arith.constant 0 : i32
    %c0_i32_0 = arith.constant 0 : i32
    %c0_i32_1 = arith.constant 0 : i32
    %c0_i32_2 = arith.constant 0 : i32
    return %c0_i32, %c0_i32_0, %c0_i32_1 : i32, i32, i32
  }
  func.func @transform_2(%arg0: i32) -> (i32, i32, i32) {
    %c0_i32 = arith.constant 0 : i32
    %c0_i32_0 = arith.constant 0 : i32
    %c0_i32_1 = arith.constant 0 : i32
    %c0_i32_2 = arith.constant 0 : i32
    return %c0_i32, %c0_i32_0, %c0_i32_1 : i32, i32, i32
  }
  func.func @transform_3(%arg0: i32) -> (i32, i32) {
    %c0_i32 = arith.constant 0 : i32
    %c0_i32_0 = arith.constant 0 : i32
    return %arg0, %c0_i32 : i32, i32
  }
}

</mosaic_0001>

<llo_original>
// kernel: tpu_custom_call.1
$region0: #{tpu_custom_call.1}
  #allocation0 [shape = 'u32[]', space=smem, size = 0x4, offset = 0x4, fixed_abs, tag = 'smem constant byte address 0x4 - core index']
  #allocation1 [shape = 'u32[144,128]{1,0:T(1,128)}', space=vmem, size = 0x12000, scoped, tag = 'internal scratch']
  %s0 = inlined_call_operand.hbm [shape: f32[512,128], index: 0, kind: input, shape index: {}]
  %s1 = inlined_call_operand.hbm [shape: bf16[3,128,128], index: 1, kind: input, shape index: {}]
  %s2 = inlined_call_operand.vmem [shape: f32[3,1,128], index: 2, kind: input, shape index: {}]
  %s3 = inlined_call_operand.hbm [shape: f32[512,128], index: 3, kind: output, shape index: {}]
  %s4 = sld [smem:[#allocation0]]
  $region53: #{tpu_custom_call.1} parent=0
    _
  %s6 = ssub.s32 1, %s4
  %s7 = scalar_select 0, %s6, %s4
  $region1: #{tpu_custom_call.1} parent=0
    #allocation2 [shape = 'u8[262144]{0}', space=vmem, size = 0x40000, scoped, tag = 'input window, operand 0']
    #allocation3 [shape = 's32[2]{0}', space=sflag, size = 0x8, scoped, tag = 'scoped memory for tpu_custom_call.1']
    #allocation4 [shape = 's32[2]{0}', space=sflag, size = 0x8, scoped, tag = 'scoped memory for tpu_custom_call.1']
    #allocation5 [shape = 'u8[98304]{0}', space=vmem, size = 0x18000, scoped, tag = 'input window, operand 1, single buffered']
    #allocation6 [shape = 's32[1]{0}', space=sflag, size = 0x4, scoped, tag = 'scoped memory for tpu_custom_call.1']
    #allocation7 [shape = 'u8[262144]{0}', space=vmem, size = 0x40000, scoped, tag = 'output window, operand 0']
    %8 = vsyncpa [#allocation3], 0
    %s9 = scalar_lea.sflag [#allocation3], 1
    %10 = vsyncpa %s9, 0
    %11 = vsyncpa [#allocation6], 0
    %12 = vsyncpa [#allocation4], 0
    %s13 = scalar_lea.sflag [#allocation4], 1
    %14 = vsyncpa %s13, 0
    loop: start=0, step=1, limit=4
    $region2: #{tpu_custom_call.1} parent=1 // loop_pre_header
      _
    $region3: #{tpu_custom_call.1} parent=1 // loop_header
      %s16 = sphi 0, %s20
      %p17 = scmp.ge.s32.totalorder %s16, 4
      %s26 = sphi 0, %s28
      %s29 = sphi 0, %s26
      %s30 = sphi 0, %s29
      %s46 = sphi 0, %s30
      %s50 = sphi 0, %s50
      %s52 = sphi 0, %s50
      %s53 = sphi 0, %s52
      %s67 = sphi 0, %s53
      %s71 = sphi 0, %s71
      %s73 = sphi 0, %s71
      %s74 = sphi 0, %s73
      %s88 = sphi 0, %s74
      %s94 = sphi 0, %s96
      %s97 = sphi 0, %s94
      %s98 = sphi 0, %s97
      %s114 = sphi 0, %s98
    $region4: #{tpu_custom_call.1} parent=1 // loop_header_branch
      %19 = sbr.rel (%p17) target = $region8
    $region5: #{tpu_custom_call.1} parent=1 // loop_body
      %s21 = ssub.s32 %s16, 1
      %s22 = ssub.s32 %s16, 2
      %s23 = sadd.s32 %s16, 1
      %s24 = ssub.s32 %s16, %s23
      %p25 = scmp.eq.s32.totalorder %s24, 0
      %s27 = sadd.s32 %s26, 1
      %s28 = scalar_select %p25, %s26, %s27
      %p31 = pneg %p25
      %p32 = scmp.eq.s32.totalorder %s16, 1
      %p33 = por %p31, %p32
      %p34 = scmp.ne.s32.totalorder %s26, %s29
      %p35 = scmp.eq.s32.totalorder %s16, 0
      %p36 = por %p34, %p35
      %p37 = scmp.ne.s32.totalorder %s26, %s29
      %p38 = scmp.eq.s32.totalorder %s21, 1
      %p39 = por %p37, %p38
      %p40 = scmp.ne.s32.totalorder %s29, %s30
      %p41 = scmp.eq.s32.totalorder %s21, 0
      %p42 = por %p40, %p41
      %p43 = scmp.ne.s32.totalorder %s29, %s30
      %p44 = scmp.eq.s32.totalorder %s22, 1
      %p45 = por %p43, %p44
      %p47 = scmp.ne.s32.totalorder %s30, %s46
      %p48 = scmp.eq.s32.totalorder %s22, 0
      %p49 = por %p47, %p48
      %s51 = sadd.s32 %s50, 1
      %p54 = scmp.eq.s32.totalorder %s16, 1
      %p55 = scmp.ne.s32.totalorder %s50, %s52
      %p56 = scmp.eq.s32.totalorder %s16, 0
      %p57 = por %p55, %p56
      %p58 = scmp.ne.s32.totalorder %s50, %s52
      %p59 = scmp.eq.s32.totalorder %s21, 1
      %p60 = por %p58, %p59
      %p61 = scmp.ne.s32.totalorder %s52, %s53
      %p62 = scmp.eq.s32.totalorder %s21, 0
      %p63 = por %p61, %p62
      %p64 = scmp.ne.s32.totalorder %s52, %s53
      %p65 = scmp.eq.s32.totalorder %s22, 1
      %p66 = por %p64, %p65
      %p68 = scmp.ne.s32.totalorder %s53, %s67
      %p69 = scmp.eq.s32.totalorder %s22, 0
      %p70 = por %p68, %p69
      %s72 = sadd.s32 %s71, 1
      %p75 = scmp.eq.s32.totalorder %s16, 1
      %p76 = scmp.ne.s32.totalorder %s71, %s73
      %p77 = scmp.eq.s32.totalorder %s16, 0
      %p78 = por %p76, %p77
      %p79 = scmp.ne.s32.totalorder %s71, %s73
      %p80 = scmp.eq.s32.totalorder %s21, 1
      %p81 = por %p79, %p80
      %p82 = scmp.ne.s32.totalorder %s73, %s74
      %p83 = scmp.eq.s32.totalorder %s21, 0
      %p84 = por %p82, %p83
      %p85 = scmp.ne.s32.totalorder %s73, %s74
      %p86 = scmp.eq.s32.totalorder %s22, 1
      %p87 = por %p85, %p86
      %p89 = scmp.ne.s32.totalorder %s74, %s88
      %p90 = scmp.eq.s32.totalorder %s22, 0
      %p91 = por %p89, %p90
      %s92 = ssub.s32 %s16, %s23
      %p93 = scmp.eq.s32.totalorder %s92, 0
      %s95 = sadd.s32 %s94, 1
      %s96 = scalar_select %p93, %s94, %s95
      %p99 = pneg %p93
      %p100 = scmp.eq.s32.totalorder %s16, 1
      %p101 = por %p99, %p100
      %p102 = scmp.ne.s32.totalorder %s94, %s97
      %p103 = scmp.eq.s32.totalorder %s16, 0
      %p104 = por %p102, %p103
      %p105 = scmp.ne.s32.totalorder %s94, %s97
      %p106 = scmp.eq.s32.totalorder %s21, 1
      %p107 = por %p105, %p106
      %p108 = scmp.ne.s32.totalorder %s97, %s98
      %p109 = scmp.eq.s32.totalorder %s21, 0
      %p110 = por %p108, %p109
      %p111 = scmp.ne.s32.totalorder %s97, %s98
      %p112 = scmp.eq.s32.totalorder %s22, 1
      %p113 = por %p111, %p112
      %p115 = scmp.ne.s32.totalorder %s98, %s114
      %p116 = scmp.eq.s32.totalorder %s22, 0
      %p117 = por %p115, %p116
      %p118 = scmp.le.s32.totalorder 1, %s16
      %p119 = scmp.lt.s32.totalorder %s16, 3
      %p120 = pnand %p118, %p119
      %p121 = pneg %p120
      // Predicated region
      $region9: #{tpu_custom_call.1} parent=5 // pred_check
        _
      $region10: #{tpu_custom_call.1} parent=5 // pred_check_branch
        %123 = sbr.rel (%p120) target = $region12
      $region11: #{tpu_custom_call.1} parent=5 // pred_region
        %s124 = ssub.s32 %s16, 1
        // Predicated region
        $region13: #{tpu_custom_call.1} parent=11 // pred_check
          %p125 = pneg %p63
        $region14: #{tpu_custom_call.1} parent=11 // pred_check_branch
          %127 = sbr.rel (%p125) target = $region16
        $region15: #{tpu_custom_call.1} parent=11 // pred_region
          %s129 = ssub.s32 3072, 3072
          %130 = vsyncadd [#allocation6], %s129
          %s131 = sshll.u32 [#allocation5], 4
          %s132 = int_to_ptr.vmem [resolvable:$true] %s131
          %137 = dma.hbm_to_vmem [thread:$0]  %s1, 3072, %s132, [#allocation6], 64, 64, 4
        $region16: #{tpu_custom_call.1} parent=11 // pred_fallthru
          _
        // Predicated region
        $region17: #{tpu_custom_call.1} parent=11 // pred_check
          %p138 = pneg %p84
        $region18: #{tpu_custom_call.1} parent=11 // pred_check_branch
          %140 = sbr.rel (%p138) target = $region20
        $region19: #{tpu_custom_call.1} parent=11 // pred_region
          _
        $region20: #{tpu_custom_call.1} parent=11 // pred_fallthru
          _
      $region12: #{tpu_custom_call.1} parent=5 // pred_fallthru
        _
      %p141 = scmp.lt.s32.totalorder %s16, 2
      // Predicated region
      $region21: #{tpu_custom_call.1} parent=5 // pred_check
        %p142 = pneg %p141
      $region22: #{tpu_custom_call.1} parent=5 // pred_check_branch
        %144 = sbr.rel (%p142) target = $region24
      $region23: #{tpu_custom_call.1} parent=5 // pred_region
        // Predicated region
        $region25: #{tpu_custom_call.1} parent=23 // pred_check
          %p145 = pneg %p36
        $region26: #{tpu_custom_call.1} parent=23 // pred_check_branch
          %147 = sbr.rel (%p145) target = $region28
        $region27: #{tpu_custom_call.1} parent=23 // pred_region
          %s148 = sand.u32 %s26, 1
          %s149 = scalar_lea.sflag [#allocation3], %s148
          %s150 = sand.u32 %s26, 1
          %s151 = smul.addr %s150, 256
          %s152 = scalar_lea.vmem [#allocation2], %s151
          %s153 = smul.u32 32, %s16
          %s155 = ssub.s32 4096, 4096
          %156 = vsyncadd %s149, %s155
          %s157 = smul.addr %s153, 128
          %s158 = scalar_lea.hbm %s0, %s157
          %s159 = sshll.u32 %s152, 4
          %s160 = int_to_ptr.vmem [resolvable:$true] %s159
          %165 = dma.hbm_to_vmem [thread:$0]  %s158, 4096, %s160, %s149, 128, 128, 8
        $region28: #{tpu_custom_call.1} parent=23 // pred_fallthru
          _
      $region24: #{tpu_custom_call.1} parent=5 // pred_fallthru
        _
      %p166 = scmp.le.s32.totalorder 1, %s16
      %p167 = scmp.lt.s32.totalorder %s16, 3
      %p168 = pnand %p166, %p167
      %p169 = pneg %p168
      // Predicated region
      $region29: #{tpu_custom_call.1} parent=5 // pred_check
        _
      $region30: #{tpu_custom_call.1} parent=5 // pred_check_branch
        %171 = sbr.rel (%p168) target = $region32
      $region31: #{tpu_custom_call.1} parent=5 // pred_region
        %s172 = ssub.s32 %s16, 1
        %s173 = sand.u32 %s29, 1
        %s174 = scalar_lea.sflag [#allocation3], %s173
        %s175 = sand.u32 %s29, 1
        %s176 = smul.addr %s175, 256
        %s177 = scalar_lea.vmem [#allocation2], %s176
        // Predicated region
        $region33: #{tpu_custom_call.1} parent=31 // pred_check
          %p178 = pneg %p42
        $region34: #{tpu_custom_call.1} parent=31 // pred_check_branch
          %180 = sbr.rel (%p178) target = $region36
        $region35: #{tpu_custom_call.1} parent=31 // pred_region
          %181 = dma.done %s174, 4096
        $region36: #{tpu_custom_call.1} parent=31 // pred_fallthru
          _
        // Predicated region
        $region37: #{tpu_custom_call.1} parent=31 // pred_check
          %p182 = pneg %p63
        $region38: #{tpu_custom_call.1} parent=31 // pred_check_branch
          %184 = sbr.rel (%p182) target = $region40
        $region39: #{tpu_custom_call.1} parent=31 // pred_region
          %185 = dma.done [#allocation6], 3072
        $region40: #{tpu_custom_call.1} parent=31 // pred_fallthru
          _
        %s186 = sand.u32 %s29, 1
        %s187 = scalar_lea.sflag [#allocation3], %s186
        %s188 = sand.u32 %s29, 1
        %s189 = smul.addr %s188, 256
        %s190 = scalar_lea.vmem [#allocation2], %s189
        %p191 = pneg %p42
        %p192 = pneg %p39
        %p193 = pneg %p63
        %p194 = pneg %p60
        %p195 = pneg %p84
        %p196 = pneg %p81
        %p197 = pneg %p110
        %p198 = pneg %p107
        %s199 = sand.u32 %s97, 1
        %s200 = scalar_lea.sflag [#allocation4], %s199
        %s201 = sand.u32 %s97, 1
        %s202 = smul.addr %s201, 256
        %s203 = scalar_lea.vmem [#allocation7], %s202
        %s204 = smul.u32 32, %s21
        %s205 = smul.u32 32, %s21
        %v207 = vld [vmem:[%s177] sm:$0xff]
        %v208 = vld [vmem:[%s177 + $0x8] sm:$0xff]
        %v209 = vld [vmem:[%s177 + $0x10] sm:$0xff]
        %v210 = vld [vmem:[%s177 + $0x18] sm:$0xff]
        %v211 = vld [vmem:[%s177 + $0x20] sm:$0xff]
        %v212 = vld [vmem:[%s177 + $0x28] sm:$0xff]
        %v213 = vld [vmem:[%s177 + $0x30] sm:$0xff]
        %v214 = vld [vmem:[%s177 + $0x38] sm:$0xff]
        %v215 = vld [vmem:[%s177 + $0x40] sm:$0xff]
        %v216 = vld [vmem:[%s177 + $0x48] sm:$0xff]
        %v217 = vld [vmem:[%s177 + $0x50] sm:$0xff]
        %v218 = vld [vmem:[%s177 + $0x58] sm:$0xff]
        %v219 = vld [vmem:[%s177 + $0x60] sm:$0xff]
        %v220 = vld [vmem:[%s177 + $0x68] sm:$0xff]
        %v221 = vld [vmem:[%s177 + $0x70] sm:$0xff]
        %v222 = vld [vmem:[%s177 + $0x78] sm:$0xff]
        %v223 = vld [vmem:[%s177 + $0x80] sm:$0xff]
        %v224 = vld [vmem:[%s177 + $0x88] sm:$0xff]
        %v225 = vld [vmem:[%s177 + $0x90] sm:$0xff]
        %v226 = vld [vmem:[%s177 + $0x98] sm:$0xff]
        %v227 = vld [vmem:[%s177 + $0xa0] sm:$0xff]
        %v228 = vld [vmem:[%s177 + $0xa8] sm:$0xff]
        %v229 = vld [vmem:[%s177 + $0xb0] sm:$0xff]
        %v230 = vld [vmem:[%s177 + $0xb8] sm:$0xff]
        %v231 = vld [vmem:[%s177 + $0xc0] sm:$0xff]
        %v232 = vld [vmem:[%s177 + $0xc8] sm:$0xff]
        %v233 = vld [vmem:[%s177 + $0xd0] sm:$0xff]
        %v234 = vld [vmem:[%s177 + $0xd8] sm:$0xff]
        %v235 = vld [vmem:[%s177 + $0xe0] sm:$0xff]
        %v236 = vld [vmem:[%s177 + $0xe8] sm:$0xff]
        %v237 = vld [vmem:[%s177 + $0xf0] sm:$0xff]
        %v238 = vld [vmem:[%s177 + $0xf8] sm:$0xff]
        %v239 = vpack.c.bf16 %v208, %v207
        %v240 = vpack.c.bf16 %v210, %v209
        %v241 = vpack.c.bf16 %v212, %v211
        %v242 = vpack.c.bf16 %v214, %v213
        %v243 = vpack.c.bf16 %v216, %v215
        %v244 = vpack.c.bf16 %v218, %v217
        %v245 = vpack.c.bf16 %v220, %v219
        %v246 = vpack.c.bf16 %v222, %v221
        %v247 = vpack.c.bf16 %v224, %v223
        %v248 = vpack.c.bf16 %v226, %v225
        %v249 = vpack.c.bf16 %v228, %v227
        %v250 = vpack.c.bf16 %v230, %v229
        %v251 = vpack.c.bf16 %v232, %v231
        %v252 = vpack.c.bf16 %v234, %v233
        %v253 = vpack.c.bf16 %v236, %v235
        %v254 = vpack.c.bf16 %v238, %v237
        %v255 = vld [vmem:[#allocation5] sm:$0xf]
        %v256 = vld [vmem:[#allocation5 + $0x4] sm:$0xf]
        %v257 = vld [vmem:[#allocation5 + $0x8] sm:$0xf]
        %v258 = vld [vmem:[#allocation5 + $0xc] sm:$0xf]
        %v259 = vld [vmem:[#allocation5 + $0x10] sm:$0xf]
        %v260 = vld [vmem:[#allocation5 + $0x14] sm:$0xf]
        %v261 = vld [vmem:[#allocation5 + $0x18] sm:$0xf]
        %v262 = vld [vmem:[#allocation5 + $0x1c] sm:$0xf]
        %v263 = vld [vmem:[#allocation5 + $0x20] sm:$0xf]
        %v264 = vld [vmem:[#allocation5 + $0x24] sm:$0xf]
        %v265 = vld [vmem:[#allocation5 + $0x28] sm:$0xf]
        %v266 = vld [vmem:[#allocation5 + $0x2c] sm:$0xf]
        %v267 = vld [vmem:[#allocation5 + $0x30] sm:$0xf]
        %v268 = vld [vmem:[#allocation5 + $0x34] sm:$0xf]
        %v269 = vld [vmem:[#allocation5 + $0x38] sm:$0xf]
        %v270 = vld [vmem:[#allocation5 + $0x3c] sm:$0xf]
        %v271 = vld [vmem:[%s2] sm:$0x1]
        %v273 = vlaneseq
        %v274 = vshrl.u32 %v273, 7
        %v275 = vsub.s32 0, %v274
        %v276 = vrot.slane %v271, %v275
        %v294 = vunpack.c.l.b16 %v255
        %v295 = vunpack.c.l.b16 %v256
        %v296 = vunpack.c.l.b16 %v257
        %v297 = vunpack.c.l.b16 %v258
        %v298 = vunpack.c.l.b16 %v259
        %v299 = vunpack.c.l.b16 %v260
        %v300 = vunpack.c.l.b16 %v261
        %v301 = vunpack.c.l.b16 %v262
        %v302 = vunpack.c.l.b16 %v263
        %v303 = vunpack.c.l.b16 %v264
        %v304 = vunpack.c.l.b16 %v265
        %v305 = vunpack.c.l.b16 %v266
        %v306 = vunpack.c.l.b16 %v267
        %v307 = vunpack.c.l.b16 %v268
        %v308 = vunpack.c.l.b16 %v269
        %v309 = vunpack.c.l.b16 %v270
        %v310 = vpack.c.b16 %v295, %v294
        %v311 = vpack.c.b16 %v297, %v296
        %v312 = vpack.c.b16 %v299, %v298
        %v313 = vpack.c.b16 %v301, %v300
        %v314 = vpack.c.b16 %v303, %v302
        %v315 = vpack.c.b16 %v305, %v304
        %v316 = vpack.c.b16 %v307, %v306
        %v317 = vpack.c.b16 %v309, %v308
        %326 = vmatprep.subr.bf16.mxu0 0
        %327 = vmatpush1.bf16.msra.mxu0 %v310
        %328 = vmatprep.subr.bf16.mxu0 0
        %329 = vmatpush1.bf16.msra.mxu0 %v311
        %330 = vmatprep.subr.bf16.mxu0 0
        %331 = vmatpush1.bf16.msra.mxu0 %v312
        %332 = vmatprep.subr.bf16.mxu0 0
        %333 = vmatpush1.bf16.msra.mxu0 %v313
        %334 = vmatprep.subr.bf16.mxu0 0
        %335 = vmatpush1.bf16.msra.mxu0 %v314
        %336 = vmatprep.subr.bf16.mxu0 0
        %337 = vmatpush1.bf16.msra.mxu0 %v315
        %338 = vmatprep.subr.bf16.mxu0 0
        %339 = vmatpush1.bf16.msra.mxu0 %v316
        %340 = vmatprep.subr.bf16.mxu0 0
        %341 = vmatpush1.bf16.msra.mxu0 %v317
        %342 = vmatprep.subr.bf16.mxu0 0
        %343 = vmatpush1.bf16.msra.mxu0 0
        %344 = vmatprep.subr.bf16.mxu0 0
        %345 = vmatpush1.bf16.msra.mxu0 0
        %346 = vmatprep.subr.bf16.mxu0 0
        %347 = vmatpush1.bf16.msra.mxu0 0
        %348 = vmatprep.subr.bf16.mxu0 0
        %349 = vmatpush1.bf16.msra.mxu0 0
        %350 = vmatprep.subr.bf16.mxu0 0
        %351 = vmatpush1.bf16.msra.mxu0 0
        %352 = vmatprep.subr.bf16.mxu0 0
        %353 = vmatpush1.bf16.msra.mxu0 0
        %354 = vmatprep.subr.bf16.mxu0 0
        %355 = vmatpush1.bf16.msra.mxu0 0
        %356 = vmatprep.subr.bf16.mxu0 0
        %357 = vmatpush1.bf16.msra.mxu0 0
        %358 = vmatprep.mubr.bf16.mxu0 0
        %359 = vmatmul.mubr.bf16.gmra.mrb[0].mxu0 %v239
        %v360 = vpop.f32.mrb[0].mxu0
        %v361 = vadd.f32 %v276, %v360
        %v362 = vpop.f32.mrb[0].mxu0
        %v363 = vpop.f32.mrb[0].mxu0
        %v364 = vadd.f32 %v276, %v363
        %v365 = vpop.f32.mrb[0].mxu0
        %366 = vmatprep.mubr.bf16.mxu0 0
        %367 = vmatmul.mubr.bf16.gmra.mrb[0].mxu0 %v240
        %v368 = vpop.f32.mrb[0].mxu0
        %v369 = vadd.f32 %v276, %v368
        %v370 = vpop.f32.mrb[0].mxu0
        %v371 = vpop.f32.mrb[0].mxu0
        %v372 = vadd.f32 %v276, %v371
        %v373 = vpop.f32.mrb[0].mxu0
        %374 = vmatprep.mubr.bf16.mxu0 0
        %375 = vmatmul.mubr.bf16.gmra.mrb[0].mxu0 %v241
        %v376 = vpop.f32.mrb[0].mxu0
        %v377 = vadd.f32 %v276, %v376
        %v378 = vpop.f32.mrb[0].mxu0
        %v379 = vpop.f32.mrb[0].mxu0
        %v380 = vadd.f32 %v276, %v379
        %v381 = vpop.f32.mrb[0].mxu0
        %382 = vmatprep.mubr.bf16.mxu0 0
        %383 = vmatmul.mubr.bf16.gmra.mrb[0].mxu0 %v242
        %v384 = vpop.f32.mrb[0].mxu0
        %v385 = vadd.f32 %v276, %v384
        %v386 = vpop.f32.mrb[0].mxu0
        %v387 = vpop.f32.mrb[0].mxu0
        %v388 = vadd.f32 %v276, %v387
        %v389 = vpop.f32.mrb[0].mxu0
        %390 = vmatprep.mubr.bf16.mxu0 0
        %391 = vmatmul.mubr.bf16.gmra.mrb[0].mxu0 %v243
        %v392 = vpop.f32.mrb[0].mxu0
        %v393 = vadd.f32 %v276, %v392
        %v394 = vpop.f32.mrb[0].mxu0
        %v395 = vpop.f32.mrb[0].mxu0
        %v396 = vadd.f32 %v276, %v395
        %v397 = vpop.f32.mrb[0].mxu0
        %398 = vmatprep.mubr.bf16.mxu0 0
        %399 = vmatmul.mubr.bf16.gmra.mrb[0].mxu0 %v244
        %v400 = vpop.f32.mrb[0].mxu0
        %v401 = vadd.f32 %v276, %v400
        %v402 = vpop.f32.mrb[0].mxu0
        %v403 = vpop.f32.mrb[0].mxu0
        %v404 = vadd.f32 %v276, %v403
        %v405 = vpop.f32.mrb[0].mxu0
        %406 = vmatprep.mubr.bf16.mxu0 0
        %407 = vmatmul.mubr.bf16.gmra.mrb[0].mxu0 %v245
        %v408 = vpop.f32.mrb[0].mxu0
        %v409 = vadd.f32 %v276, %v408
        %v410 = vpop.f32.mrb[0].mxu0
        %v411 = vpop.f32.mrb[0].mxu0
        %v412 = vadd.f32 %v276, %v411
        %v413 = vpop.f32.mrb[0].mxu0
        %414 = vmatprep.mubr.bf16.mxu0 0
        %415 = vmatmul.mubr.bf16.gmra.mrb[0].mxu0 %v246
        %v416 = vpop.f32.mrb[0].mxu0
        %v417 = vadd.f32 %v276, %v416
        %v418 = vpop.f32.mrb[0].mxu0
        %v419 = vpop.f32.mrb[0].mxu0
        %v420 = vadd.f32 %v276, %v419
        %v421 = vpop.f32.mrb[0].mxu0
        %422 = vmatprep.mubr.bf16.mxu0 0
        %423 = vmatmul.mubr.bf16.gmra.mrb[0].mxu0 %v247
        %v424 = vpop.f32.mrb[0].mxu0
        %v425 = vadd.f32 %v276, %v424
        %v426 = vpop.f32.mrb[0].mxu0
        %v427 = vpop.f32.mrb[0].mxu0
        %v428 = vadd.f32 %v276, %v427
        %v429 = vpop.f32.mrb[0].mxu0
        %430 = vmatprep.mubr.bf16.mxu0 0
        %431 = vmatmul.mubr.bf16.gmra.mrb[0].mxu0 %v248
        %v432 = vpop.f32.mrb[0].mxu0
        %v433 = vadd.f32 %v276, %v432
        %v434 = vpop.f32.mrb[0].mxu0
        %v435 = vpop.f32.mrb[0].mxu0
        %v436 = vadd.f32 %v276, %v435
        %v437 = vpop.f32.mrb[0].mxu0
        %438 = vmatprep.mubr.bf16.mxu0 0
        %439 = vmatmul.mubr.bf16.gmra.mrb[0].mxu0 %v249
        %v440 = vpop.f32.mrb[0].mxu0
        %v441 = vadd.f32 %v276, %v440
        %v442 = vpop.f32.mrb[0].mxu0
        %v443 = vpop.f32.mrb[0].mxu0
        %v444 = vadd.f32 %v276, %v443
        %v445 = vpop.f32.mrb[0].mxu0
        %446 = vmatprep.mubr.bf16.mxu0 0
        %447 = vmatmul.mubr.bf16.gmra.mrb[0].mxu0 %v250
        %v448 = vpop.f32.mrb[0].mxu0
        %v449 = vadd.f32 %v276, %v448
        %v450 = vpop.f32.mrb[0].mxu0
        %v451 = vpop.f32.mrb[0].mxu0
        %v452 = vadd.f32 %v276, %v451
        %v453 = vpop.f32.mrb[0].mxu0
        %454 = vmatprep.mubr.bf16.mxu0 0
        %455 = vmatmul.mubr.bf16.gmra.mrb[0].mxu0 %v251
        %v456 = vpop.f32.mrb[0].mxu0
        %v457 = vadd.f32 %v276, %v456
        %v458 = vpop.f32.mrb[0].mxu0
        %v459 = vpop.f32.mrb[0].mxu0
        %v460 = vadd.f32 %v276, %v459
        %v461 = vpop.f32.mrb[0].mxu0
        %462 = vmatprep.mubr.bf16.mxu0 0
        %463 = vmatmul.mubr.bf16.gmra.mrb[0].mxu0 %v252
        %v464 = vpop.f32.mrb[0].mxu0
        %v465 = vadd.f32 %v276, %v464
        %v466 = vpop.f32.mrb[0].mxu0
        %v467 = vpop.f32.mrb[0].mxu0
        %v468 = vadd.f32 %v276, %v467
        %v469 = vpop.f32.mrb[0].mxu0
        %470 = vmatprep.mubr.bf16.mxu0 0
        %471 = vmatmul.mubr.bf16.gmra.mrb[0].mxu0 %v253
        %v472 = vpop.f32.mrb[0].mxu0
        %v473 = vadd.f32 %v276, %v472
        %v474 = vpop.f32.mrb[0].mxu0
        %v475 = vpop.f32.mrb[0].mxu0
        %v476 = vadd.f32 %v276, %v475
        %v477 = vpop.f32.mrb[0].mxu0
        %478 = vmatprep.mubr.bf16.mxu0 0
        %479 = vmatmul.mubr.bf16.gmra.mrb[0].mxu0 %v254
        %v480 = vpop.f32.mrb[0].mxu0
        %v481 = vadd.f32 %v276, %v480
        %v482 = vpop.f32.mrb[0].mxu0
        %v483 = vpop.f32.mrb[0].mxu0
        %v484 = vadd.f32 %v276, %v483
        %v485 = vpop.f32.mrb[0].mxu0
        %486 = vdwg.mxu0
        %v487 = vmax.f32 %v361, 0.0
        %v488 = vmax.f32 %v364, 0.0
        %v489 = vmax.f32 %v369, 0.0
        %v490 = vmax.f32 %v372, 0.0
        %v491 = vmax.f32 %v377, 0.0
        %v492 = vmax.f32 %v380, 0.0
        %v493 = vmax.f32 %v385, 0.0
        %v494 = vmax.f32 %v388, 0.0
        %v495 = vmax.f32 %v393, 0.0
        %v496 = vmax.f32 %v396, 0.0
        %v497 = vmax.f32 %v401, 0.0
        %v498 = vmax.f32 %v404, 0.0
        %v499 = vmax.f32 %v409, 0.0
        %v500 = vmax.f32 %v412, 0.0
        %v501 = vmax.f32 %v417, 0.0
        %v502 = vmax.f32 %v420, 0.0
        %v503 = vmax.f32 %v425, 0.0
        %v504 = vmax.f32 %v428, 0.0
        %v505 = vmax.f32 %v433, 0.0
        %v506 = vmax.f32 %v436, 0.0
        %v507 = vmax.f32 %v441, 0.0
        %v508 = vmax.f32 %v444, 0.0
        %v509 = vmax.f32 %v449, 0.0
        %v510 = vmax.f32 %v452, 0.0
        %v511 = vmax.f32 %v457, 0.0
        %v512 = vmax.f32 %v460, 0.0
        %v513 = vmax.f32 %v465, 0.0
        %v514 = vmax.f32 %v468, 0.0
        %v515 = vmax.f32 %v473, 0.0
        %v516 = vmax.f32 %v476, 0.0
        %v517 = vmax.f32 %v481, 0.0
        %v518 = vmax.f32 %v484, 0.0
        %v519 = vpack.c.bf16 %v488, %v487
        %v520 = vpack.c.bf16 %v490, %v489
        %v521 = vpack.c.bf16 %v492, %v491
        %v522 = vpack.c.bf16 %v494, %v493
        %v523 = vpack.c.bf16 %v496, %v495
        %v524 = vpack.c.bf16 %v498, %v497
        %v525 = vpack.c.bf16 %v500, %v499
        %v526 = vpack.c.bf16 %v502, %v501
        %v527 = vpack.c.bf16 %v504, %v503
        %v528 = vpack.c.bf16 %v506, %v505
        %v529 = vpack.c.bf16 %v508, %v507
        %v530 = vpack.c.bf16 %v510, %v509
        %v531 = vpack.c.bf16 %v512, %v511
        %v532 = vpack.c.bf16 %v514, %v513
        %v533 = vpack.c.bf16 %v516, %v515
        %v534 = vpack.c.bf16 %v518, %v517
        %s535 = scalar_lea.vmem [#allocation5], 64
        %v536 = vld [vmem:[%s535] sm:$0xf]
        %v537 = vld [vmem:[%s535 + $0x4] sm:$0xf]
        %v538 = vld [vmem:[%s535 + $0x8] sm:$0xf]
        %v539 = vld [vmem:[%s535 + $0xc] sm:$0xf]
        %v540 = vld [vmem:[%s535 + $0x10] sm:$0xf]
        %v541 = vld [vmem:[%s535 + $0x14] sm:$0xf]
        %v542 = vld [vmem:[%s535 + $0x18] sm:$0xf]
        %v543 = vld [vmem:[%s535 + $0x1c] sm:$0xf]
        %v544 = vld [vmem:[%s535 + $0x20] sm:$0xf]
        %v545 = vld [vmem:[%s535 + $0x24] sm:$0xf]
        %v546 = vld [vmem:[%s535 + $0x28] sm:$0xf]
        %v547 = vld [vmem:[%s535 + $0x2c] sm:$0xf]
        %v548 = vld [vmem:[%s535 + $0x30] sm:$0xf]
        %v549 = vld [vmem:[%s535 + $0x34] sm:$0xf]
        %v550 = vld [vmem:[%s535 + $0x38] sm:$0xf]
        %v551 = vld [vmem:[%s535 + $0x3c] sm:$0xf]
        %s552 = scalar_lea.vmem %s2, 1
        %v553 = vld [vmem:[%s552] sm:$0x1]
        %v555 = vlaneseq
        %v556 = vshrl.u32 %v555, 7
        %v557 = vsub.s32 0, %v556
        %v558 = vrot.slane %v553, %v557
        %v576 = vunpack.c.l.b16 %v536
        %v577 = vunpack.c.l.b16 %v537
        %v578 = vunpack.c.l.b16 %v538
        %v579 = vunpack.c.l.b16 %v539
        %v580 = vunpack.c.l.b16 %v540
        %v581 = vunpack.c.l.b16 %v541
        %v582 = vunpack.c.l.b16 %v542
        %v583 = vunpack.c.l.b16 %v543
        %v584 = vunpack.c.l.b16 %v544
        %v585 = vunpack.c.l.b16 %v545
        %v586 = vunpack.c.l.b16 %v546
        %v587 = vunpack.c.l.b16 %v547
        %v588 = vunpack.c.l.b16 %v548
        %v589 = vunpack.c.l.b16 %v549
        %v590 = vunpack.c.l.b16 %v550
        %v591 = vunpack.c.l.b16 %v551
        %v592 = vpack.c.b16 %v577, %v576
        %v593 = vpack.c.b16 %v579, %v578
        %v594 = vpack.c.b16 %v581, %v580
        %v595 = vpack.c.b16 %v583, %v582
        %v596 = vpack.c.b16 %v585, %v584
        %v597 = vpack.c.b16 %v587, %v586
        %v598 = vpack.c.b16 %v589, %v588
        %v599 = vpack.c.b16 %v591, %v590
        %608 = vmatprep.subr.bf16.mxu0 0
        %609 = vmatpush1.bf16.msra.mxu0 %v592
        %610 = vmatprep.subr.bf16.mxu0 0
        %611 = vmatpush1.bf16.msra.mxu0 %v593
        %612 = vmatprep.subr.bf16.mxu0 0
        %613 = vmatpush1.bf16.msra.mxu0 %v594
        %614 = vmatprep.subr.bf16.mxu0 0
        %615 = vmatpush1.bf16.msra.mxu0 %v595
        %616 = vmatprep.subr.bf16.mxu0 0
        %617 = vmatpush1.bf16.msra.mxu0 %v596
        %618 = vmatprep.subr.bf16.mxu0 0
        %619 = vmatpush1.bf16.msra.mxu0 %v597
        %620 = vmatprep.subr.bf16.mxu0 0
        %621 = vmatpush1.bf16.msra.mxu0 %v598
        %622 = vmatprep.subr.bf16.mxu0 0
        %623 = vmatpush1.bf16.msra.mxu0 %v599
        %624 = vmatprep.subr.bf16.mxu0 0
        %625 = vmatpush1.bf16.msra.mxu0 0
        %626 = vmatprep.subr.bf16.mxu0 0
        %627 = vmatpush1.bf16.msra.mxu0 0
        %628 = vmatprep.subr.bf16.mxu0 0
        %629 = vmatpush1.bf16.msra.mxu0 0
        %630 = vmatprep.subr.bf16.mxu0 0
        %631 = vmatpush1.bf16.msra.mxu0 0
        %632 = vmatprep.subr.bf16.mxu0 0
        %633 = vmatpush1.bf16.msra.mxu0 0
        %634 = vmatprep.subr.bf16.mxu0 0
        %635 = vmatpush1.bf16.msra.mxu0 0
        %636 = vmatprep.subr.bf16.mxu0 0
        %637 = vmatpush1.bf16.msra.mxu0 0
        %638 = vmatprep.subr.bf16.mxu0 0
        %639 = vmatpush1.bf16.msra.mxu0 0
        %640 = vmatprep.mubr.bf16.mxu0 0
        %641 = vmatmul.mubr.bf16.gmra.mrb[0].mxu0 %v519
        %v642 = vpop.f32.mrb[0].mxu0
        %v643 = vadd.f32 %v558, %v642
        %v644 = vpop.f32.mrb[0].mxu0
        %v645 = vpop.f32.mrb[0].mxu0
        %v646 = vadd.f32 %v558, %v645
        %v647 = vpop.f32.mrb[0].mxu0
        %648 = vmatprep.mubr.bf16.mxu0 0
        %649 = vmatmul.mubr.bf16.gmra.mrb[0].mxu0 %v520
        %v650 = vpop.f32.mrb[0].mxu0
        %v651 = vadd.f32 %v558, %v650
        %v652 = vpop.f32.mrb[0].mxu0
        %v653 = vpop.f32.mrb[0].mxu0
        %v654 = vadd.f32 %v558, %v653
        %v655 = vpop.f32.mrb[0].mxu0
        %656 = vmatprep.mubr.bf16.mxu0 0
        %657 = vmatmul.mubr.bf16.gmra.mrb[0].mxu0 %v521
        %v658 = vpop.f32.mrb[0].mxu0
        %v659 = vadd.f32 %v558, %v658
        %v660 = vpop.f32.mrb[0].mxu0
        %v661 = vpop.f32.mrb[0].mxu0
        %v662 = vadd.f32 %v558, %v661
        %v663 = vpop.f32.mrb[0].mxu0
        %664 = vmatprep.mubr.bf16.mxu0 0
        %665 = vmatmul.mubr.bf16.gmra.mrb[0].mxu0 %v522
        %v666 = vpop.f32.mrb[0].mxu0
        %v667 = vadd.f32 %v558, %v666
        %v668 = vpop.f32.mrb[0].mxu0
        %v669 = vpop.f32.mrb[0].mxu0
        %v670 = vadd.f32 %v558, %v669
        %v671 = vpop.f32.mrb[0].mxu0
        %672 = vmatprep.mubr.bf16.mxu0 0
        %673 = vmatmul.mubr.bf16.gmra.mrb[0].mxu0 %v523
        %v674 = vpop.f32.mrb[0].mxu0
        %v675 = vadd.f32 %v558, %v674
        %v676 = vpop.f32.mrb[0].mxu0
        %v677 = vpop.f32.mrb[0].mxu0
        %v678 = vadd.f32 %v558, %v677
        %v679 = vpop.f32.mrb[0].mxu0
        %680 = vmatprep.mubr.bf16.mxu0 0
        %681 = vmatmul.mubr.bf16.gmra.mrb[0].mxu0 %v524
        %v682 = vpop.f32.mrb[0].mxu0
        %v683 = vadd.f32 %v558, %v682
        %v684 = vpop.f32.mrb[0].mxu0
        %v685 = vpop.f32.mrb[0].mxu0
        %v686 = vadd.f32 %v558, %v685
        %v687 = vpop.f32.mrb[0].mxu0
        %688 = vmatprep.mubr.bf16.mxu0 0
        %689 = vmatmul.mubr.bf16.gmra.mrb[0].mxu0 %v525
        %v690 = vpop.f32.mrb[0].mxu0
        %v691 = vadd.f32 %v558, %v690
        %v692 = vpop.f32.mrb[0].mxu0
        %v693 = vpop.f32.mrb[0].mxu0
        %v694 = vadd.f32 %v558, %v693
        %v695 = vpop.f32.mrb[0].mxu0
        %696 = vmatprep.mubr.bf16.mxu0 0
        %697 = vmatmul.mubr.bf16.gmra.mrb[0].mxu0 %v526
        %v698 = vpop.f32.mrb[0].mxu0
        %v699 = vadd.f32 %v558, %v698
        %v700 = vpop.f32.mrb[0].mxu0
        %v701 = vpop.f32.mrb[0].mxu0
        %v702 = vadd.f32 %v558, %v701
        %v703 = vpop.f32.mrb[0].mxu0
        %704 = vmatprep.mubr.bf16.mxu0 0
        %705 = vmatmul.mubr.bf16.gmra.mrb[0].mxu0 %v527
        %v706 = vpop.f32.mrb[0].mxu0
        %v707 = vadd.f32 %v558, %v706
        %v708 = vpop.f32.mrb[0].mxu0
        %v709 = vpop.f32.mrb[0].mxu0
        %v710 = vadd.f32 %v558, %v709
        %v711 = vpop.f32.mrb[0].mxu0
        %712 = vmatprep.mubr.bf16.mxu0 0
        %713 = vmatmul.mubr.bf16.gmra.mrb[0].mxu0 %v528
        %v714 = vpop.f32.mrb[0].mxu0
        %v715 = vadd.f32 %v558, %v714
        %v716 = vpop.f32.mrb[0].mxu0
        %v717 = vpop.f32.mrb[0].mxu0
        %v718 = vadd.f32 %v558, %v717
        %v719 = vpop.f32.mrb[0].mxu0
        %720 = vmatprep.mubr.bf16.mxu0 0
        %721 = vmatmul.mubr.bf16.gmra.mrb[0].mxu0 %v529
        %v722 = vpop.f32.mrb[0].mxu0
        %v723 = vadd.f32 %v558, %v722
        %v724 = vpop.f32.mrb[0].mxu0
        %v725 = vpop.f32.mrb[0].mxu0
        %v726 = vadd.f32 %v558, %v725
        %v727 = vpop.f32.mrb[0].mxu0
        %728 = vmatprep.mubr.bf16.mxu0 0
        %729 = vmatmul.mubr.bf16.gmra.mrb[0].mxu0 %v530
        %v730 = vpop.f32.mrb[0].mxu0
        %v731 = vadd.f32 %v558, %v730
        %v732 = vpop.f32.mrb[0].mxu0
        %v733 = vpop.f32.mrb[0].mxu0
        %v734 = vadd.f32 %v558, %v733
        %v735 = vpop.f32.mrb[0].mxu0
        %736 = vmatprep.mubr.bf16.mxu0 0
        %737 = vmatmul.mubr.bf16.gmra.mrb[0].mxu0 %v531
        %v738 = vpop.f32.mrb[0].mxu0
        %v739 = vadd.f32 %v558, %v738
        %v740 = vpop.f32.mrb[0].mxu0
        %v741 = vpop.f32.mrb[0].mxu0
        %v742 = vadd.f32 %v558, %v741
        %v743 = vpop.f32.mrb[0].mxu0
        %744 = vmatprep.mubr.bf16.mxu0 0
        %745 = vmatmul.mubr.bf16.gmra.mrb[0].mxu0 %v532
        %v746 = vpop.f32.mrb[0].mxu0
        %v747 = vadd.f32 %v558, %v746
        %v748 = vpop.f32.mrb[0].mxu0
        %v749 = vpop.f32.mrb[0].mxu0
        %v750 = vadd.f32 %v558, %v749
        %v751 = vpop.f32.mrb[0].mxu0
        %752 = vmatprep.mubr.bf16.mxu0 0
        %753 = vmatmul.mubr.bf16.gmra.mrb[0].mxu0 %v533
        %v754 = vpop.f32.mrb[0].mxu0
        %v755 = vadd.f32 %v558, %v754
        %v756 = vpop.f32.mrb[0].mxu0
        %v757 = vpop.f32.mrb[0].mxu0
        %v758 = vadd.f32 %v558, %v757
        %v759 = vpop.f32.mrb[0].mxu0
        %760 = vmatprep.mubr.bf16.mxu0 0
        %761 = vmatmul.mubr.bf16.gmra.mrb[0].mxu0 %v534
        %v762 = vpop.f32.mrb[0].mxu0
        %v763 = vadd.f32 %v558, %v762
        %v764 = vpop.f32.mrb[0].mxu0
        %v765 = vpop.f32.mrb[0].mxu0
        %v766 = vadd.f32 %v558, %v765
        %v767 = vpop.f32.mrb[0].mxu0
        %768 = vdwg.mxu0
        %v769 = vmax.f32 %v643, 0.0
        %v770 = vmax.f32 %v646, 0.0
        %v771 = vmax.f32 %v651, 0.0
        %v772 = vmax.f32 %v654, 0.0
        %v773 = vmax.f32 %v659, 0.0
        %v774 = vmax.f32 %v662, 0.0
        %v775 = vmax.f32 %v667, 0.0
        %v776 = vmax.f32 %v670, 0.0
        %v777 = vmax.f32 %v675, 0.0
        %v778 = vmax.f32 %v678, 0.0
        %v779 = vmax.f32 %v683, 0.0
        %v780 = vmax.f32 %v686, 0.0
        %v781 = vmax.f32 %v691, 0.0
        %v782 = vmax.f32 %v694, 0.0
        %v783 = vmax.f32 %v699, 0.0
        %v784 = vmax.f32 %v702, 0.0
        %v785 = vmax.f32 %v707, 0.0
        %v786 = vmax.f32 %v710, 0.0
        %v787 = vmax.f32 %v715, 0.0
        %v788 = vmax.f32 %v718, 0.0
        %v789 = vmax.f32 %v723, 0.0
        %v790 = vmax.f32 %v726, 0.0
        %v791 = vmax.f32 %v731, 0.0
        %v792 = vmax.f32 %v734, 0.0
        %v793 = vmax.f32 %v739, 0.0
        %v794 = vmax.f32 %v742, 0.0
        %v795 = vmax.f32 %v747, 0.0
        %v796 = vmax.f32 %v750, 0.0
        %v797 = vmax.f32 %v755, 0.0
        %v798 = vmax.f32 %v758, 0.0
        %v799 = vmax.f32 %v763, 0.0
        %v800 = vmax.f32 %v766, 0.0
        %v801 = vpack.c.bf16 %v770, %v769
        %v802 = vpack.c.bf16 %v772, %v771
        %v803 = vpack.c.bf16 %v774, %v773
        %v804 = vpack.c.bf16 %v776, %v775
        %v805 = vpack.c.bf16 %v778, %v777
        %v806 = vpack.c.bf16 %v780, %v779
        %v807 = vpack.c.bf16 %v782, %v781
        %v808 = vpack.c.bf16 %v784, %v783
        %v809 = vpack.c.bf16 %v786, %v785
        %v810 = vpack.c.bf16 %v788, %v787
        %v811 = vpack.c.bf16 %v790, %v789
        %v812 = vpack.c.bf16 %v792, %v791
        %v813 = vpack.c.bf16 %v794, %v793
        %v814 = vpack.c.bf16 %v796, %v795
        %v815 = vpack.c.bf16 %v798, %v797
        %v816 = vpack.c.bf16 %v800, %v799
        %s817 = scalar_lea.vmem [#allocation5], 128
        %v818 = vld [vmem:[%s817] sm:$0xf]
        %v819 = vld [vmem:[%s817 + $0x4] sm:$0xf]
        %v820 = vld [vmem:[%s817 + $0x8] sm:$0xf]
        %v821 = vld [vmem:[%s817 + $0xc] sm:$0xf]
        %v822 = vld [vmem:[%s817 + $0x10] sm:$0xf]
        %v823 = vld [vmem:[%s817 + $0x14] sm:$0xf]
        %v824 = vld [vmem:[%s817 + $0x18] sm:$0xf]
        %v825 = vld [vmem:[%s817 + $0x1c] sm:$0xf]
        %v826 = vld [vmem:[%s817 + $0x20] sm:$0xf]
        %v827 = vld [vmem:[%s817 + $0x24] sm:$0xf]
        %v828 = vld [vmem:[%s817 + $0x28] sm:$0xf]
        %v829 = vld [vmem:[%s817 + $0x2c] sm:$0xf]
        %v830 = vld [vmem:[%s817 + $0x30] sm:$0xf]
        %v831 = vld [vmem:[%s817 + $0x34] sm:$0xf]
        %v832 = vld [vmem:[%s817 + $0x38] sm:$0xf]
        %v833 = vld [vmem:[%s817 + $0x3c] sm:$0xf]
        %s834 = scalar_lea.vmem %s2, 2
        %v835 = vld [vmem:[%s834] sm:$0x1]
        %v837 = vlaneseq
        %v838 = vshrl.u32 %v837, 7
        %v839 = vsub.s32 0, %v838
        %v840 = vrot.slane %v835, %v839
        %v858 = vunpack.c.l.b16 %v818
        %v859 = vunpack.c.l.b16 %v819
        %v860 = vunpack.c.l.b16 %v820
        %v861 = vunpack.c.l.b16 %v821
        %v862 = vunpack.c.l.b16 %v822
        %v863 = vunpack.c.l.b16 %v823
        %v864 = vunpack.c.l.b16 %v824
        %v865 = vunpack.c.l.b16 %v825
        %v866 = vunpack.c.l.b16 %v826
        %v867 = vunpack.c.l.b16 %v827
        %v868 = vunpack.c.l.b16 %v828
        %v869 = vunpack.c.l.b16 %v829
        %v870 = vunpack.c.l.b16 %v830
        %v871 = vunpack.c.l.b16 %v831
        %v872 = vunpack.c.l.b16 %v832
        %v873 = vunpack.c.l.b16 %v833
        %v874 = vpack.c.b16 %v859, %v858
        %v875 = vpack.c.b16 %v861, %v860
        %v876 = vpack.c.b16 %v863, %v862
        %v877 = vpack.c.b16 %v865, %v864
        %v878 = vpack.c.b16 %v867, %v866
        %v879 = vpack.c.b16 %v869, %v868
        %v880 = vpack.c.b16 %v871, %v870
        %v881 = vpack.c.b16 %v873, %v872
        %890 = vmatprep.subr.bf16.mxu0 0
        %891 = vmatpush1.bf16.msra.mxu0 %v874
        %892 = vmatprep.subr.bf16.mxu0 0
        %893 = vmatpush1.bf16.msra.mxu0 %v875
        %894 = vmatprep.subr.bf16.mxu0 0
        %895 = vmatpush1.bf16.msra.mxu0 %v876
        %896 = vmatprep.subr.bf16.mxu0 0
        %897 = vmatpush1.bf16.msra.mxu0 %v877
        %898 = vmatprep.subr.bf16.mxu0 0
        %899 = vmatpush1.bf16.msra.mxu0 %v878
        %900 = vmatprep.subr.bf16.mxu0 0
        %901 = vmatpush1.bf16.msra.mxu0 %v879
        %902 = vmatprep.subr.bf16.mxu0 0
        %903 = vmatpush1.bf16.msra.mxu0 %v880
        %904 = vmatprep.subr.bf16.mxu0 0
        %905 = vmatpush1.bf16.msra.mxu0 %v881
        %906 = vmatprep.subr.bf16.mxu0 0
        %907 = vmatpush1.bf16.msra.mxu0 0
        %908 = vmatprep.subr.bf16.mxu0 0
        %909 = vmatpush1.bf16.msra.mxu0 0
        %910 = vmatprep.subr.bf16.mxu0 0
        %911 = vmatpush1.bf16.msra.mxu0 0
        %912 = vmatprep.subr.bf16.mxu0 0
        %913 = vmatpush1.bf16.msra.mxu0 0
        %914 = vmatprep.subr.bf16.mxu0 0
        %915 = vmatpush1.bf16.msra.mxu0 0
        %916 = vmatprep.subr.bf16.mxu0 0
        %917 = vmatpush1.bf16.msra.mxu0 0
        %918 = vmatprep.subr.bf16.mxu0 0
        %919 = vmatpush1.bf16.msra.mxu0 0
        %920 = vmatprep.subr.bf16.mxu0 0
        %921 = vmatpush1.bf16.msra.mxu0 0
        %922 = vmatprep.mubr.bf16.mxu0 0
        %923 = vmatmul.mubr.bf16.gmra.mrb[0].mxu0 %v801
        %v924 = vpop.f32.mrb[0].mxu0
        %v925 = vadd.f32 %v840, %v924
        %v926 = vpop.f32.mrb[0].mxu0
        %v927 = vpop.f32.mrb[0].mxu0
        %v928 = vadd.f32 %v840, %v927
        %v929 = vpop.f32.mrb[0].mxu0
        %930 = vmatprep.mubr.bf16.mxu0 0
        %931 = vmatmul.mubr.bf16.gmra.mrb[0].mxu0 %v802
        %v932 = vpop.f32.mrb[0].mxu0
        %v933 = vadd.f32 %v840, %v932
        %v934 = vpop.f32.mrb[0].mxu0
        %v935 = vpop.f32.mrb[0].mxu0
        %v936 = vadd.f32 %v840, %v935
        %v937 = vpop.f32.mrb[0].mxu0
        %938 = vmatprep.mubr.bf16.mxu0 0
        %939 = vmatmul.mubr.bf16.gmra.mrb[0].mxu0 %v803
        %v940 = vpop.f32.mrb[0].mxu0
        %v941 = vadd.f32 %v840, %v940
        %v942 = vpop.f32.mrb[0].mxu0
        %v943 = vpop.f32.mrb[0].mxu0
        %v944 = vadd.f32 %v840, %v943
        %v945 = vpop.f32.mrb[0].mxu0
        %946 = vmatprep.mubr.bf16.mxu0 0
        %947 = vmatmul.mubr.bf16.gmra.mrb[0].mxu0 %v804
        %v948 = vpop.f32.mrb[0].mxu0
        %v949 = vadd.f32 %v840, %v948
        %v950 = vpop.f32.mrb[0].mxu0
        %v951 = vpop.f32.mrb[0].mxu0
        %v952 = vadd.f32 %v840, %v951
        %v953 = vpop.f32.mrb[0].mxu0
        %954 = vmatprep.mubr.bf16.mxu0 0
        %955 = vmatmul.mubr.bf16.gmra.mrb[0].mxu0 %v805
        %v956 = vpop.f32.mrb[0].mxu0
        %v957 = vadd.f32 %v840, %v956
        %v958 = vpop.f32.mrb[0].mxu0
        %v959 = vpop.f32.mrb[0].mxu0
        %v960 = vadd.f32 %v840, %v959
        %v961 = vpop.f32.mrb[0].mxu0
        %962 = vmatprep.mubr.bf16.mxu0 0
        %963 = vmatmul.mubr.bf16.gmra.mrb[0].mxu0 %v806
        %v964 = vpop.f32.mrb[0].mxu0
        %v965 = vadd.f32 %v840, %v964
        %v966 = vpop.f32.mrb[0].mxu0
        %v967 = vpop.f32.mrb[0].mxu0
        %v968 = vadd.f32 %v840, %v967
        %v969 = vpop.f32.mrb[0].mxu0
        %970 = vmatprep.mubr.bf16.mxu0 0
        %971 = vmatmul.mubr.bf16.gmra.mrb[0].mxu0 %v807
        %v972 = vpop.f32.mrb[0].mxu0
        %v973 = vadd.f32 %v840, %v972
        %v974 = vpop.f32.mrb[0].mxu0
        %v975 = vpop.f32.mrb[0].mxu0
        %v976 = vadd.f32 %v840, %v975
        %v977 = vpop.f32.mrb[0].mxu0
        %978 = vmatprep.mubr.bf16.mxu0 0
        %979 = vmatmul.mubr.bf16.gmra.mrb[0].mxu0 %v808
        %v980 = vpop.f32.mrb[0].mxu0
        %v981 = vadd.f32 %v840, %v980
        %v982 = vpop.f32.mrb[0].mxu0
        %v983 = vpop.f32.mrb[0].mxu0
        %v984 = vadd.f32 %v840, %v983
        %v985 = vpop.f32.mrb[0].mxu0
        %986 = vmatprep.mubr.bf16.mxu0 0
        %987 = vmatmul.mubr.bf16.gmra.mrb[0].mxu0 %v809
        %v988 = vpop.f32.mrb[0].mxu0
        %v989 = vadd.f32 %v840, %v988
        %v990 = vpop.f32.mrb[0].mxu0
        %v991 = vpop.f32.mrb[0].mxu0
        %v992 = vadd.f32 %v840, %v991
        %v993 = vpop.f32.mrb[0].mxu0
        %994 = vmatprep.mubr.bf16.mxu0 0
        %995 = vmatmul.mubr.bf16.gmra.mrb[0].mxu0 %v810
        %v996 = vpop.f32.mrb[0].mxu0
        %v997 = vadd.f32 %v840, %v996
        %v998 = vpop.f32.mrb[0].mxu0
        %v999 = vpop.f32.mrb[0].mxu0
        %v1000 = vadd.f32 %v840, %v999
        %v1001 = vpop.f32.mrb[0].mxu0
        %1002 = vmatprep.mubr.bf16.mxu0 0
        %1003 = vmatmul.mubr.bf16.gmra.mrb[0].mxu0 %v811
        %v1004 = vpop.f32.mrb[0].mxu0
        %v1005 = vadd.f32 %v840, %v1004
        %v1006 = vpop.f32.mrb[0].mxu0
        %v1007 = vpop.f32.mrb[0].mxu0
        %v1008 = vadd.f32 %v840, %v1007
        %v1009 = vpop.f32.mrb[0].mxu0
        %1010 = vmatprep.mubr.bf16.mxu0 0
        %1011 = vmatmul.mubr.bf16.gmra.mrb[0].mxu0 %v812
        %v1012 = vpop.f32.mrb[0].mxu0
        %v1013 = vadd.f32 %v840, %v1012
        %v1014 = vpop.f32.mrb[0].mxu0
        %v1015 = vpop.f32.mrb[0].mxu0
        %v1016 = vadd.f32 %v840, %v1015
        %v1017 = vpop.f32.mrb[0].mxu0
        %1018 = vmatprep.mubr.bf16.mxu0 0
        %1019 = vmatmul.mubr.bf16.gmra.mrb[0].mxu0 %v813
        %v1020 = vpop.f32.mrb[0].mxu0
        %v1021 = vadd.f32 %v840, %v1020
        %v1022 = vpop.f32.mrb[0].mxu0
        %v1023 = vpop.f32.mrb[0].mxu0
        %v1024 = vadd.f32 %v840, %v1023
        %v1025 = vpop.f32.mrb[0].mxu0
        %1026 = vmatprep.mubr.bf16.mxu0 0
        %1027 = vmatmul.mubr.bf16.gmra.mrb[0].mxu0 %v814
        %v1028 = vpop.f32.mrb[0].mxu0
        %v1029 = vadd.f32 %v840, %v1028
        %v1030 = vpop.f32.mrb[0].mxu0
        %v1031 = vpop.f32.mrb[0].mxu0
        %v1032 = vadd.f32 %v840, %v1031
        %v1033 = vpop.f32.mrb[0].mxu0
        %1034 = vmatprep.mubr.bf16.mxu0 0
        %1035 = vmatmul.mubr.bf16.gmra.mrb[0].mxu0 %v815
        %v1036 = vpop.f32.mrb[0].mxu0
        %v1037 = vadd.f32 %v840, %v1036
        %v1038 = vpop.f32.mrb[0].mxu0
        %v1039 = vpop.f32.mrb[0].mxu0
        %v1040 = vadd.f32 %v840, %v1039
        %v1041 = vpop.f32.mrb[0].mxu0
        %1042 = vmatprep.mubr.bf16.mxu0 0
        %1043 = vmatmul.mubr.bf16.gmra.mrb[0].mxu0 %v816
        %v1044 = vpop.f32.mrb[0].mxu0
        %v1045 = vadd.f32 %v840, %v1044
        %v1046 = vpop.f32.mrb[0].mxu0
        %v1047 = vpop.f32.mrb[0].mxu0
        %v1048 = vadd.f32 %v840, %v1047
        %v1049 = vpop.f32.mrb[0].mxu0
        %1050 = vdwg.mxu0
        %v1051 = vmax.f32 %v925, 0.0
        %v1052 = vmax.f32 %v928, 0.0
        %v1053 = vmax.f32 %v933, 0.0
        %v1054 = vmax.f32 %v936, 0.0
        %v1055 = vmax.f32 %v941, 0.0
        %v1056 = vmax.f32 %v944, 0.0
        %v1057 = vmax.f32 %v949, 0.0
        %v1058 = vmax.f32 %v952, 0.0
        %v1059 = vmax.f32 %v957, 0.0
        %v1060 = vmax.f32 %v960, 0.0
        %v1061 = vmax.f32 %v965, 0.0
        %v1062 = vmax.f32 %v968, 0.0
        %v1063 = vmax.f32 %v973, 0.0
        %v1064 = vmax.f32 %v976, 0.0
        %v1065 = vmax.f32 %v981, 0.0
        %v1066 = vmax.f32 %v984, 0.0
        %v1067 = vmax.f32 %v989, 0.0
        %v1068 = vmax.f32 %v992, 0.0
        %v1069 = vmax.f32 %v997, 0.0
        %v1070 = vmax.f32 %v1000, 0.0
        %v1071 = vmax.f32 %v1005, 0.0
        %v1072 = vmax.f32 %v1008, 0.0
        %v1073 = vmax.f32 %v1013, 0.0
        %v1074 = vmax.f32 %v1016, 0.0
        %v1075 = vmax.f32 %v1021, 0.0
        %v1076 = vmax.f32 %v1024, 0.0
        %v1077 = vmax.f32 %v1029, 0.0
        %v1078 = vmax.f32 %v1032, 0.0
        %v1079 = vmax.f32 %v1037, 0.0
        %v1080 = vmax.f32 %v1040, 0.0
        %v1081 = vmax.f32 %v1045, 0.0
        %v1082 = vmax.f32 %v1048, 0.0
        %1083 = vst [vmem:[%s203] sm:$0xff] %v1051
        %1084 = vst [vmem:[%s203 + $0x8] sm:$0xff] %v1052
        %1085 = vst [vmem:[%s203 + $0x10] sm:$0xff] %v1053
        %1086 = vst [vmem:[%s203 + $0x18] sm:$0xff] %v1054
        %1087 = vst [vmem:[%s203 + $0x20] sm:$0xff] %v1055
        %1088 = vst [vmem:[%s203 + $0x28] sm:$0xff] %v1056
        %1089 = vst [vmem:[%s203 + $0x30] sm:$0xff] %v1057
        %1090 = vst [vmem:[%s203 + $0x38] sm:$0xff] %v1058
        %1091 = vst [vmem:[%s203 + $0x40] sm:$0xff] %v1059
        %1092 = vst [vmem:[%s203 + $0x48] sm:$0xff] %v1060
        %1093 = vst [vmem:[%s203 + $0x50] sm:$0xff] %v1061
        %1094 = vst [vmem:[%s203 + $0x58] sm:$0xff] %v1062
        %1095 = vst [vmem:[%s203 + $0x60] sm:$0xff] %v1063
        %1096 = vst [vmem:[%s203 + $0x68] sm:$0xff] %v1064
        %1097 = vst [vmem:[%s203 + $0x70] sm:$0xff] %v1065
        %1098 = vst [vmem:[%s203 + $0x78] sm:$0xff] %v1066
        %1099 = vst [vmem:[%s203 + $0x80] sm:$0xff] %v1067
        %1100 = vst [vmem:[%s203 + $0x88] sm:$0xff] %v1068
        %1101 = vst [vmem:[%s203 + $0x90] sm:$0xff] %v1069
        %1102 = vst [vmem:[%s203 + $0x98] sm:$0xff] %v1070
        %1103 = vst [vmem:[%s203 + $0xa0] sm:$0xff] %v1071
        %1104 = vst [vmem:[%s203 + $0xa8] sm:$0xff] %v1072
        %1105 = vst [vmem:[%s203 + $0xb0] sm:$0xff] %v1073
        %1106 = vst [vmem:[%s203 + $0xb8] sm:$0xff] %v1074
        %1107 = vst [vmem:[%s203 + $0xc0] sm:$0xff] %v1075
        %1108 = vst [vmem:[%s203 + $0xc8] sm:$0xff] %v1076
        %1109 = vst [vmem:[%s203 + $0xd0] sm:$0xff] %v1077
        %1110 = vst [vmem:[%s203 + $0xd8] sm:$0xff] %v1078
        %1111 = vst [vmem:[%s203 + $0xe0] sm:$0xff] %v1079
        %1112 = vst [vmem:[%s203 + $0xe8] sm:$0xff] %v1080
        %1113 = vst [vmem:[%s203 + $0xf0] sm:$0xff] %v1081
        %1114 = vst [vmem:[%s203 + $0xf8] sm:$0xff] %v1082
        %s1115 = sand.u32 %s97, 1
        %s1116 = scalar_lea.sflag [#allocation4], %s1115
        %s1117 = sand.u32 %s97, 1
        %s1118 = smul.addr %s1117, 256
        %s1119 = scalar_lea.vmem [#allocation7], %s1118
        // Predicated region
        $region41: #{tpu_custom_call.1} parent=31 // pred_check
          %p1120 = pneg %p107
        $region42: #{tpu_custom_call.1} parent=31 // pred_check_branch
          %1122 = sbr.rel (%p1120) target = $region44
        $region43: #{tpu_custom_call.1} parent=31 // pred_region
          %s1123 = smul.u32 32, %s21
          %s1125 = ssub.s32 4096, 4096
          %1126 = vsyncadd %s1116, %s1125
          %s1127 = smul.addr %s1123, 128
          %s1128 = scalar_lea.hbm %s3, %s1127
          %s1129 = sshll.u32 %s1119, 4
          %s1130 = int_to_ptr.vmem [resolvable:$true] %s1129
          %1135 = dma.vmem_to_hbm [thread:$0]  %s1130, 4096, %s1128, %s1116, 128, 128, 8
        $region44: #{tpu_custom_call.1} parent=31 // pred_fallthru
          _
      $region32: #{tpu_custom_call.1} parent=5 // pred_fallthru
        _
      %p1136 = scmp.le.s32.totalorder 2, %s16
      // Predicated region
      $region45: #{tpu_custom_call.1} parent=5 // pred_check
        %p1137 = pneg %p1136
      $region46: #{tpu_custom_call.1} parent=5 // pred_check_branch
        %1139 = sbr.rel (%p1137) target = $region48
      $region47: #{tpu_custom_call.1} parent=5 // pred_region
        %s1140 = ssub.s32 %s16, 2
        // Predicated region
        $region49: #{tpu_custom_call.1} parent=47 // pred_check
          %p1141 = pneg %p113
        $region50: #{tpu_custom_call.1} parent=47 // pred_check_branch
          %1143 = sbr.rel (%p1141) target = $region52
        $region51: #{tpu_custom_call.1} parent=47 // pred_region
          %s1144 = sand.u32 %s98, 1
          %s1145 = scalar_lea.sflag [#allocation4], %s1144
          %s1146 = sand.u32 %s98, 1
          %s1147 = smul.addr %s1146, 256
          %s1148 = scalar_lea.vmem [#allocation7], %s1147
          %1149 = dma.done %s1145, 4096
        $region52: #{tpu_custom_call.1} parent=47 // pred_fallthru
          _
      $region48: #{tpu_custom_call.1} parent=5 // pred_fallthru
        _
    $region6: #{tpu_custom_call.1} parent=1 // loop_footer
      %s20 = sadd.s32 1, %s16
    $region7: #{tpu_custom_call.1} parent=1 // loop_footer_branch
      %15 = sbr.rel target = $region3
    $region8: #{tpu_custom_call.1} parent=1 // loop_exit
      _
    %1150 = vsyncpa [#allocation3], 1
    %s1151 = scalar_lea.sflag [#allocation3], 1
    %1152 = vsyncpa %s1151, 1
    %1153 = vsyncpa [#allocation6], 1
    %1154 = vsyncpa [#allocation4], 1
    %s1155 = scalar_lea.sflag [#allocation4], 1
    %1156 = vsyncpa %s1155, 1

</llo_original>
